<compile_context>
chip_gen: v5e
topology: v5e:2x2
jax: 0.10.0
libtpu: 0.0.40
codegen_flags: <defaults>
</compile_context>

<pallas_src>
import jax
import jax.numpy as jnp
from jax.experimental import pallas as pl
from jax.experimental.pallas import tpu as pltpu

NEG_SLOPE = 0.01   # F.leaky_relu default negative_slope
LANES = 128        # lane-dense padded feature width (hidden and N_flight)


def _round_up(x, m):
    return ((x + m - 1) // m) * m


def _leaky_relu(x):
    return jnp.where(x > 0, x, NEG_SLOPE * x)


def policy_mlp_kernel(x_ref, w1_ref, b1_ref, w2_ref, b2_ref, w3_ref, b3_ref, out_ref):
    """Fused 3-layer MLP on one (TB, 128) batch tile.

    x / weights are bf16 (MXU inputs); accumulation, bias-add and leaky_relu
    are f32; output tile is a lane-dense (TB, 128) f32 slab.
    """
    x = x_ref[...]                                                     # (TB, 128) bf16

    h1 = jnp.dot(x, w1_ref[...], preferred_element_type=jnp.float32)  # (TB, 128) f32
    h1 = _leaky_relu(h1 + b1_ref[...])

    h2 = jnp.dot(h1.astype(jnp.bfloat16), w2_ref[...],
                 preferred_element_type=jnp.float32)                  # (TB, 128) f32
    h2 = _leaky_relu(h2 + b2_ref[...])

    out = jnp.dot(h2.astype(jnp.bfloat16), w3_ref[...],
                  preferred_element_type=jnp.float32)                 # (TB, 128) f32
    out_ref[...] = out + b3_ref[...]


def _pad2d(a, rows, cols):
    """Zero-pad a 2-D array up to (rows, cols)."""
    r, c = a.shape
    return jnp.pad(a, ((0, rows - r), (0, cols - c)))


def policy_forward(x, params):
    """x: (B, N_flight) float32; params: dict of (in_features, out_features) weights."""
    w1, b1 = params["w1"], params["b1"]
    w2, b2 = params["w2"], params["b2"]
    w3, b3 = params["w3"], params["b3"]

    B, n_flight = x.shape
    hidden = w1.shape[1]
    assert n_flight <= LANES and hidden <= LANES, "single-tile feature padding only"

    # --- pad everything to lane-dense 128-wide slabs (zeros are exact:
    #     leaky_relu(0) == 0, so padded lanes stay zero through all layers) ---
    w1p = _pad2d(w1, LANES, LANES).astype(jnp.bfloat16)   # (128, 128)
    w2p = _pad2d(w2, LANES, LANES).astype(jnp.bfloat16)
    w3p = _pad2d(w3, LANES, LANES).astype(jnp.bfloat16)
    b1p = _pad2d(b1, 1, LANES)                            # (1, 128) f32
    b2p = _pad2d(b2, 1, LANES)
    b3p = _pad2d(b3, 1, LANES)

    # --- tile the batch; pad B so every block is full and (8,128)-aligned ---
    TB = min(512, _round_up(B, 8))
    B_pad = _round_up(B, TB)
    xp = jnp.pad(x, ((0, B_pad - B), (0, LANES - n_flight))).astype(jnp.bfloat16)

    resident = lambda shape: pl.BlockSpec(shape, lambda i: (0, 0))

    out_pad = pl.pallas_call(
        policy_mlp_kernel,
        out_shape=jax.ShapeDtypeStruct((B_pad, LANES), jnp.float32),
        grid=(B_pad // TB,),
        in_specs=[
            pl.BlockSpec((TB, LANES), lambda i: (i, 0)),   # x tile (pipelined)
            resident((LANES, LANES)),                      # w1 (VMEM-resident)
            resident((1, LANES)),                          # b1
            resident((LANES, LANES)),                      # w2
            resident((1, LANES)),                          # b2
            resident((LANES, LANES)),                      # w3
            resident((1, LANES)),                          # b3
        ],
        out_specs=pl.BlockSpec((TB, LANES), lambda i: (i, 0)),
        compiler_params=pltpu.CompilerParams(
            dimension_semantics=("parallel",)),
    )(xp, w1p, b1p, w2p, b2p, w3p, b3p)

    # slice the real rows / columns back out
    return out_pad[:B, :n_flight]


def init_policy_params(key, n_flight, hidden=64):
    """Deterministic synthetic init (shapes match the nn.Linear layers).

    Weights are stored already transposed: (in_features, out_features).
    """
    k1, k2, k3, k4, k5, k6 = jax.random.split(key, 6)

    def uniform(k, shape, fan_in):
        bound = 1.0 / jnp.sqrt(fan_in)
        return jax.random.uniform(k, shape, jnp.float32, -bound, bound)

    return {
        "w1": uniform(k1, (n_flight, hidden), n_flight),
        "b1": uniform(k2, (1, hidden), n_flight),
        "w2": uniform(k3, (hidden, hidden), hidden),
        "b2": uniform(k4, (1, hidden), hidden),
        "w3": uniform(k5, (hidden, n_flight), hidden),
        "b3": uniform(k6, (1, n_flight), hidden),
    }


if __name__ == "__main__":
    N_FLIGHT = 8   # number of flights -> input/output feature size
    BATCH = 2

    key = jax.random.PRNGKey(0)
    k_params, k_x = jax.random.split(key)

    params = init_policy_params(k_params, N_FLIGHT)
    # "flatten(x, N_flight)" in the original code produces a length-N_flight
    # float vector; here we build it directly as (BATCH, N_FLIGHT).
    x = jax.random.normal(k_x, (BATCH, N_FLIGHT), dtype=jnp.float32)

    out = policy_forward(x, params)
    jax.block_until_ready(out)
    assert out.shape == (BATCH, N_FLIGHT)

    # Reference 1: same bf16-matmul / f32-accumulate recipe (tight tolerance).
    def ref_bf16(x, p):
        def lin(a, w, b):
            return jnp.dot(a.astype(jnp.bfloat16), w.astype(jnp.bfloat16),
                           preferred_element_type=jnp.float32) + b
        h1 = _leaky_relu(lin(x, p["w1"], p["b1"]))
        h2 = _leaky_relu(lin(h1, p["w2"], p["b2"]))
        return lin(h2, p["w3"], p["b3"])

    # Reference 2: full-f32 forward of the original module (loose tolerance,
    # difference is only the bf16 matmul-input rounding).
    def ref_f32(x, p):
        h1 = _leaky_relu(x @ p["w1"] + p["b1"])
        h2 = _leaky_relu(h1 @ p["w2"] + p["b2"])
        return h2 @ p["w3"] + p["b3"]

    assert jnp.allclose(out, ref_bf16(x, params), atol=1e-5, rtol=1e-5)
    assert jnp.allclose(out, ref_f32(x, params), atol=2e-2, rtol=2e-2)

    print("KERNEL_OK")
</pallas_src>

<mosaic_0001>
module attributes {stable_mosaic.version = 11 : i64} {
  func.func @policy_mlp_kernel(%arg0: i32, %arg1: memref<8x128xbf16, #tpu.memory_space<vmem>>, %arg2: memref<128x128xbf16, #tpu.memory_space<vmem>>, %arg3: memref<1x128xf32, #tpu.memory_space<vmem>>, %arg4: memref<128x128xbf16, #tpu.memory_space<vmem>>, %arg5: memref<1x128xf32, #tpu.memory_space<vmem>>, %arg6: memref<128x128xbf16, #tpu.memory_space<vmem>>, %arg7: memref<1x128xf32, #tpu.memory_space<vmem>>, %arg8: memref<8x128xf32, #tpu.memory_space<vmem>>) attributes {dimension_semantics = [#tpu.dimension_semantics<parallel>], iteration_bounds = array<i64: 1>, scalar_prefetch = 0 : i64, scratch_operands = 0 : i64, tpu.core_type = #tpu.core_type<tc>, window_params = [{transform_indices = @transform_0, window_bounds = array<i64: 8, 128>}, {pipeline_mode = #tpu.pipeline_mode<synchronous>, transform_indices = @transform_1, window_bounds = array<i64: 128, 128>}, {pipeline_mode = #tpu.pipeline_mode<synchronous>, transform_indices = @transform_2, window_bounds = array<i64: 1, 128>}, {pipeline_mode = #tpu.pipeline_mode<synchronous>, transform_indices = @transform_3, window_bounds = array<i64: 128, 128>}, {pipeline_mode = #tpu.pipeline_mode<synchronous>, transform_indices = @transform_4, window_bounds = array<i64: 1, 128>}, {pipeline_mode = #tpu.pipeline_mode<synchronous>, transform_indices = @transform_5, window_bounds = array<i64: 128, 128>}, {pipeline_mode = #tpu.pipeline_mode<synchronous>, transform_indices = @transform_6, window_bounds = array<i64: 1, 128>}, {transform_indices = @transform_7, window_bounds = array<i64: 8, 128>}]} {
    %c0 = arith.constant 0 : index
    %c0_0 = arith.constant 0 : index
    %0 = vector.load %arg1[%c0, %c0_0] : memref<8x128xbf16, #tpu.memory_space<vmem>>, vector<8x128xbf16>
    %c0_1 = arith.constant 0 : index
    %c0_2 = arith.constant 0 : index
    %1 = vector.load %arg2[%c0_1, %c0_2] : memref<128x128xbf16, #tpu.memory_space<vmem>>, vector<128x128xbf16>
    %cst = arith.constant dense<0.000000e+00> : vector<8x128xf32>
    %2 = tpu.matmul %0, %1, %cst {dimension_numbers = #tpu.dot_dimension_numbers<[1], [0], [0], [1], [0, 0, 1, 1], [], []>} : vector<8x128xbf16>, vector<128x128xbf16>, vector<8x128xf32> -> vector<8x128xf32>
    %c0_3 = arith.constant 0 : index
    %c0_4 = arith.constant 0 : index
    %3 = vector.load %arg3[%c0_3, %c0_4] : memref<1x128xf32, #tpu.memory_space<vmem>>, vector<1x128xf32>
    %4 = vector.broadcast %3 : vector<1x128xf32> to vector<8x128xf32>
    %5 = arith.addf %2, %4 : vector<8x128xf32>
    %cst_5 = arith.constant 0.000000e+00 : f32
    %6 = vector.broadcast %cst_5 : f32 to vector<8x128xf32>
    %7 = arith.cmpf ogt, %5, %6 : vector<8x128xf32>
    %cst_6 = arith.constant 0.00999999977 : f32
    %8 = vector.broadcast %cst_6 : f32 to vector<8x128xf32>
    %9 = arith.mulf %8, %5 : vector<8x128xf32>
    %10 = arith.select %7, %5, %9 : vector<8x128xi1>, vector<8x128xf32>
    %11 = arith.truncf %10 : vector<8x128xf32> to vector<8x128xbf16>
    %c0_7 = arith.constant 0 : index
    %c0_8 = arith.constant 0 : index
    %12 = vector.load %arg4[%c0_7, %c0_8] : memref<128x128xbf16, #tpu.memory_space<vmem>>, vector<128x128xbf16>
    %cst_9 = arith.constant dense<0.000000e+00> : vector<8x128xf32>
    %13 = tpu.matmul %11, %12, %cst_9 {dimension_numbers = #tpu.dot_dimension_numbers<[1], [0], [0], [1], [0, 0, 1, 1], [], []>} : vector<8x128xbf16>, vector<128x128xbf16>, vector<8x128xf32> -> vector<8x128xf32>
    %c0_10 = arith.constant 0 : index
    %c0_11 = arith.constant 0 : index
    %14 = vector.load %arg5[%c0_10, %c0_11] : memref<1x128xf32, #tpu.memory_space<vmem>>, vector<1x128xf32>
    %15 = vector.broadcast %14 : vector<1x128xf32> to vector<8x128xf32>
    %16 = arith.addf %13, %15 : vector<8x128xf32>
    %cst_12 = arith.constant 0.000000e+00 : f32
    %17 = vector.broadcast %cst_12 : f32 to vector<8x128xf32>
    %18 = arith.cmpf ogt, %16, %17 : vector<8x128xf32>
    %cst_13 = arith.constant 0.00999999977 : f32
    %19 = vector.broadcast %cst_13 : f32 to vector<8x128xf32>
    %20 = arith.mulf %19, %16 : vector<8x128xf32>
    %21 = arith.select %18, %16, %20 : vector<8x128xi1>, vector<8x128xf32>
    %22 = arith.truncf %21 : vector<8x128xf32> to vector<8x128xbf16>
    %c0_14 = arith.constant 0 : index
    %c0_15 = arith.constant 0 : index
    %23 = vector.load %arg6[%c0_14, %c0_15] : memref<128x128xbf16, #tpu.memory_space<vmem>>, vector<128x128xbf16>
    %cst_16 = arith.constant dense<0.000000e+00> : vector<8x128xf32>
    %24 = tpu.matmul %22, %23, %cst_16 {dimension_numbers = #tpu.dot_dimension_numbers<[1], [0], [0], [1], [0, 0, 1, 1], [], []>} : vector<8x128xbf16>, vector<128x128xbf16>, vector<8x128xf32> -> vector<8x128xf32>
    %c0_17 = arith.constant 0 : index
    %c0_18 = arith.constant 0 : index
    %25 = vector.load %arg7[%c0_17, %c0_18] : memref<1x128xf32, #tpu.memory_space<vmem>>, vector<1x128xf32>
    %26 = vector.broadcast %25 : vector<1x128xf32> to vector<8x128xf32>
    %27 = arith.addf %24, %26 : vector<8x128xf32>
    %c0_19 = arith.constant 0 : index
    %c0_20 = arith.constant 0 : index
    %28 = vector.load %arg8[%c0_19, %c0_20] : memref<8x128xf32, #tpu.memory_space<vmem>>, vector<8x128xf32>
    tpu.vector_store %arg8[%c0_19, %c0_20], %27 {strides = array<i32>} : memref<8x128xf32, #tpu.memory_space<vmem>>, vector<8x128xf32>,
    return
  }
  func.func @transform_0(%arg0: i32) -> (i32, i32) {
    %c0_i32 = arith.constant 0 : i32
    %c0_i32_0 = arith.constant 0 : i32
    return %arg0, %c0_i32 : i32, i32
  }
  func.func @transform_1(%arg0: i32) -> (i32, i32) {
    %c0_i32 = arith.constant 0 : i32
    %c0_i32_0 = arith.constant 0 : i32
    %c0_i32_1 = arith.constant 0 : i32
    return %c0_i32, %c0_i32_0 : i32, i32
  }
  func.func @transform_2(%arg0: i32) -> (i32, i32) {
    %c0_i32 = arith.constant 0 : i32
    %c0_i32_0 = arith.constant 0 : i32
    %c0_i32_1 = arith.constant 0 : i32
    return %c0_i32, %c0_i32_0 : i32, i32
  }
  func.func @transform_3(%arg0: i32) -> (i32, i32) {
    %c0_i32 = arith.constant 0 : i32
    %c0_i32_0 = arith.constant 0 : i32
    %c0_i32_1 = arith.constant 0 : i32
    return %c0_i32, %c0_i32_0 : i32, i32
  }
  func.func @transform_4(%arg0: i32) -> (i32, i32) {
    %c0_i32 = arith.constant 0 : i32
    %c0_i32_0 = arith.constant 0 : i32
    %c0_i32_1 = arith.constant 0 : i32
    return %c0_i32, %c0_i32_0 : i32, i32
  }
  func.func @transform_5(%arg0: i32) -> (i32, i32) {
    %c0_i32 = arith.constant 0 : i32
    %c0_i32_0 = arith.constant 0 : i32
    %c0_i32_1 = arith.constant 0 : i32
    return %c0_i32, %c0_i32_0 : i32, i32
  }
  func.func @transform_6(%arg0: i32) -> (i32, i32) {
    %c0_i32 = arith.constant 0 : i32
    %c0_i32_0 = arith.constant 0 : i32
    %c0_i32_1 = arith.constant 0 : i32
    return %c0_i32, %c0_i32_0 : i32, i32
  }
  func.func @transform_7(%arg0: i32) -> (i32, i32) {
    %c0_i32 = arith.constant 0 : i32
    %c0_i32_0 = arith.constant 0 : i32
    return %arg0, %c0_i32 : i32, i32
  }
}

</mosaic_0001>

<llo_original>
// kernel: tpu_custom_call.1
$region0: #{tpu_custom_call.1}
  #allocation0 [shape = 'u32[]', space=smem, size = 0x4, offset = 0x4, fixed_abs, tag = 'smem constant byte address 0x4 - core index']
  #allocation1 [shape = 'u32[72,128]{1,0:T(1,128)}', space=vmem, size = 0x9000, scoped, tag = 'internal scratch']
  %s0 = inlined_call_operand.hbm [shape: bf16[8,128], index: 0, kind: input, shape index: {}]
  %s1 = inlined_call_operand.hbm [shape: bf16[128,128], index: 1, kind: input, shape index: {}]
  %s2 = inlined_call_operand.vmem [shape: f32[1,128], index: 2, kind: input, shape index: {}]
  %s3 = inlined_call_operand.hbm [shape: bf16[128,128], index: 3, kind: input, shape index: {}]
  %s4 = inlined_call_operand.vmem [shape: f32[1,128], index: 4, kind: input, shape index: {}]
  %s5 = inlined_call_operand.hbm [shape: bf16[128,128], index: 5, kind: input, shape index: {}]
  %s6 = inlined_call_operand.vmem [shape: f32[1,128], index: 6, kind: input, shape index: {}]
  %s7 = inlined_call_operand.hbm [shape: f32[8,128], index: 7, kind: output, shape index: {}]
  %s8 = sld [smem:[#allocation0]]
  $region54: #{tpu_custom_call.1} parent=0
    _
  %s10 = ssub.s32 1, %s8
  %s11 = scalar_select 0, %s10, %s8
  $region1: #{tpu_custom_call.1} parent=0
    #allocation2 [shape = 'u8[2048]{0}', space=vmem, size = 0x800, scoped, tag = 'input window, operand 0, single buffered']
    #allocation3 [shape = 's32[1]{0}', space=sflag, size = 0x4, scoped, tag = 'scoped memory for tpu_custom_call.1']
    #allocation4 [shape = 's32[1]{0}', space=sflag, size = 0x4, scoped, tag = 'scoped memory for tpu_custom_call.1']
    #allocation5 [shape = 'u8[32768]{0}', space=vmem, size = 0x8000, scoped, tag = 'input window, operand 1, single buffered']
    #allocation6 [shape = 's32[1]{0}', space=sflag, size = 0x4, scoped, tag = 'scoped memory for tpu_custom_call.1']
    #allocation7 [shape = 'u8[32768]{0}', space=vmem, size = 0x8000, scoped, tag = 'input window, operand 3, single buffered']
    #allocation8 [shape = 'u8[32768]{0}', space=vmem, size = 0x8000, scoped, tag = 'input window, operand 5, single buffered']
    #allocation9 [shape = 's32[1]{0}', space=sflag, size = 0x4, scoped, tag = 'scoped memory for tpu_custom_call.1']
    #allocation10 [shape = 'u8[4096]{0}', space=vmem, size = 0x1000, scoped, tag = 'output window, operand 0, single buffered']
    %12 = vsyncpa [#allocation3], 0
    %13 = vsyncpa [#allocation6], 0
    %14 = vsyncpa [#allocation9], 0
    %15 = vsyncpa [#allocation4], 0
    // Predicated region
    $region2: #{tpu_custom_call.1} parent=1 // pred_check
      _
    $region3: #{tpu_custom_call.1} parent=1 // pred_check_branch
      %17 = sbr.rel (0) target = $region5
    $region4: #{tpu_custom_call.1} parent=1 // pred_region
      %19 = vsyncadd [#allocation3], 0
      %s21 = sshll.u32 %s0, 4
      %s22 = int_to_ptr.hbm [resolvable:$true] %s21
      %s23 = sshll.u32 [#allocation2], 4
      %s24 = int_to_ptr.vmem [resolvable:$true] %s23
      %26 = dma.hbm_to_vmem [thread:$0]  %s22, 64, %s24, [#allocation3]
    $region5: #{tpu_custom_call.1} parent=1 // pred_fallthru
      _
    // Predicated region
    $region6: #{tpu_custom_call.1} parent=1 // pred_check
      _
    $region7: #{tpu_custom_call.1} parent=1 // pred_check_branch
      %28 = sbr.rel (0) target = $region9
    $region8: #{tpu_custom_call.1} parent=1 // pred_region
      %30 = vsyncadd [#allocation6], 0
      %s31 = sshll.u32 %s1, 4
      %s32 = int_to_ptr.hbm [resolvable:$true] %s31
      %s33 = sshll.u32 [#allocation5], 4
      %s34 = int_to_ptr.vmem [resolvable:$true] %s33
      %39 = dma.hbm_to_vmem [thread:$0]  %s32, 1024, %s34, [#allocation6], 64, 64, 4
    $region9: #{tpu_custom_call.1} parent=1 // pred_fallthru
      _
    // Predicated region
    $region10: #{tpu_custom_call.1} parent=1 // pred_check
      _
    $region11: #{tpu_custom_call.1} parent=1 // pred_check_branch
      %41 = sbr.rel (0) target = $region13
    $region12: #{tpu_custom_call.1} parent=1 // pred_region
      _
    $region13: #{tpu_custom_call.1} parent=1 // pred_fallthru
      _
    // Predicated region
    $region14: #{tpu_custom_call.1} parent=1 // pred_check
      _
    $region15: #{tpu_custom_call.1} parent=1 // pred_check_branch
      %43 = sbr.rel (0) target = $region17
    $region16: #{tpu_custom_call.1} parent=1 // pred_region
      %45 = vsyncadd [#allocation6], 0
      %s46 = sshll.u32 %s3, 4
      %s47 = int_to_ptr.hbm [resolvable:$true] %s46
      %s48 = sshll.u32 [#allocation7], 4
      %s49 = int_to_ptr.vmem [resolvable:$true] %s48
      %54 = dma.hbm_to_vmem [thread:$0]  %s47, 1024, %s49, [#allocation6], 64, 64, 4
    $region17: #{tpu_custom_call.1} parent=1 // pred_fallthru
      _
    // Predicated region
    $region18: #{tpu_custom_call.1} parent=1 // pred_check
      _
    $region19: #{tpu_custom_call.1} parent=1 // pred_check_branch
      %56 = sbr.rel (0) target = $region21
    $region20: #{tpu_custom_call.1} parent=1 // pred_region
      _
    $region21: #{tpu_custom_call.1} parent=1 // pred_fallthru
      _
    // Predicated region
    $region22: #{tpu_custom_call.1} parent=1 // pred_check
      _
    $region23: #{tpu_custom_call.1} parent=1 // pred_check_branch
      %58 = sbr.rel (0) target = $region25
    $region24: #{tpu_custom_call.1} parent=1 // pred_region
      %60 = vsyncadd [#allocation9], 0
      %s61 = sshll.u32 %s5, 4
      %s62 = int_to_ptr.hbm [resolvable:$true] %s61
      %s63 = sshll.u32 [#allocation8], 4
      %s64 = int_to_ptr.vmem [resolvable:$true] %s63
      %69 = dma.hbm_to_vmem [thread:$0]  %s62, 1024, %s64, [#allocation9], 64, 64, 4
    $region25: #{tpu_custom_call.1} parent=1 // pred_fallthru
      _
    // Predicated region
    $region26: #{tpu_custom_call.1} parent=1 // pred_check
      _
    $region27: #{tpu_custom_call.1} parent=1 // pred_check_branch
      %71 = sbr.rel (0) target = $region29
    $region28: #{tpu_custom_call.1} parent=1 // pred_region
      _
    $region29: #{tpu_custom_call.1} parent=1 // pred_fallthru
      _
    // Predicated region
    $region30: #{tpu_custom_call.1} parent=1 // pred_check
      _
    $region31: #{tpu_custom_call.1} parent=1 // pred_check_branch
      %73 = sbr.rel (0) target = $region33
    $region32: #{tpu_custom_call.1} parent=1 // pred_region
      %75 = dma.done [#allocation3], 64
    $region33: #{tpu_custom_call.1} parent=1 // pred_fallthru
      _
    // Predicated region
    $region34: #{tpu_custom_call.1} parent=1 // pred_check
      _
    $region35: #{tpu_custom_call.1} parent=1 // pred_check_branch
      %77 = sbr.rel (0) target = $region37
    $region36: #{tpu_custom_call.1} parent=1 // pred_region
      %79 = dma.done [#allocation6], 1024
    $region37: #{tpu_custom_call.1} parent=1 // pred_fallthru
      _
    // Predicated region
    $region38: #{tpu_custom_call.1} parent=1 // pred_check
      _
    $region39: #{tpu_custom_call.1} parent=1 // pred_check_branch
      %81 = sbr.rel (0) target = $region41
    $region40: #{tpu_custom_call.1} parent=1 // pred_region
      %83 = dma.done [#allocation6], 1024
    $region41: #{tpu_custom_call.1} parent=1 // pred_fallthru
      _
    // Predicated region
    $region42: #{tpu_custom_call.1} parent=1 // pred_check
      _
    $region43: #{tpu_custom_call.1} parent=1 // pred_check_branch
      %85 = sbr.rel (0) target = $region45
    $region44: #{tpu_custom_call.1} parent=1 // pred_region
      %87 = dma.done [#allocation9], 1024
    $region45: #{tpu_custom_call.1} parent=1 // pred_fallthru
      _
    %v88 = vld [vmem:[#allocation2] sm:$0xf]
    %v89 = vld [vmem:[#allocation5] sm:$0xf]
    %v90 = vld [vmem:[#allocation5 + $0x4] sm:$0xf]
    %v91 = vld [vmem:[#allocation5 + $0x8] sm:$0xf]
    %v92 = vld [vmem:[#allocation5 + $0xc] sm:$0xf]
    %v93 = vld [vmem:[#allocation5 + $0x10] sm:$0xf]
    %v94 = vld [vmem:[#allocation5 + $0x14] sm:$0xf]
    %v95 = vld [vmem:[#allocation5 + $0x18] sm:$0xf]
    %v96 = vld [vmem:[#allocation5 + $0x1c] sm:$0xf]
    %v97 = vld [vmem:[#allocation5 + $0x20] sm:$0xf]
    %v98 = vld [vmem:[#allocation5 + $0x24] sm:$0xf]
    %v99 = vld [vmem:[#allocation5 + $0x28] sm:$0xf]
    %v100 = vld [vmem:[#allocation5 + $0x2c] sm:$0xf]
    %v101 = vld [vmem:[#allocation5 + $0x30] sm:$0xf]
    %v102 = vld [vmem:[#allocation5 + $0x34] sm:$0xf]
    %v103 = vld [vmem:[#allocation5 + $0x38] sm:$0xf]
    %v104 = vld [vmem:[#allocation5 + $0x3c] sm:$0xf]
    %v105 = vld [vmem:[%s2] sm:$0x1]
    %v107 = vperm.slane %v105, 0
    %v125 = vunpack.c.l.b16 %v89
    %v126 = vunpack.c.l.b16 %v90
    %v127 = vunpack.c.l.b16 %v91
    %v128 = vunpack.c.l.b16 %v92
    %v129 = vunpack.c.l.b16 %v93
    %v130 = vunpack.c.l.b16 %v94
    %v131 = vunpack.c.l.b16 %v95
    %v132 = vunpack.c.l.b16 %v96
    %v133 = vunpack.c.l.b16 %v97
    %v134 = vunpack.c.l.b16 %v98
    %v135 = vunpack.c.l.b16 %v99
    %v136 = vunpack.c.l.b16 %v100
    %v137 = vunpack.c.l.b16 %v101
    %v138 = vunpack.c.l.b16 %v102
    %v139 = vunpack.c.l.b16 %v103
    %v140 = vunpack.c.l.b16 %v104
    %v141 = vpack.c.b16 %v126, %v125
    %v142 = vpack.c.b16 %v128, %v127
    %v143 = vpack.c.b16 %v130, %v129
    %v144 = vpack.c.b16 %v132, %v131
    %v145 = vpack.c.b16 %v134, %v133
    %v146 = vpack.c.b16 %v136, %v135
    %v147 = vpack.c.b16 %v138, %v137
    %v148 = vpack.c.b16 %v140, %v139
    %157 = vmatpush.bf16.msra.mxu0 %v148
    %158 = vmatpush.bf16.msra.mxu0 %v147
    %159 = vmatpush.bf16.msra.mxu0 %v146
    %160 = vmatpush.bf16.msra.mxu0 %v145
    %161 = vmatpush.bf16.msra.mxu0 %v144
    %162 = vmatpush.bf16.msra.mxu0 %v143
    %163 = vmatpush.bf16.msra.mxu0 %v142
    %164 = vmatpush.bf16.msra.mxu0 %v141
    %165 = vmatmul.bf16.gmra.mxu0 %v88
    %v166 = vpop.f32.mrf.mxu0
    %v167 = vadd.f32 %v107, %v166
    %v168 = vpop.f32.mrf.mxu0
    %169 = vdwg.mxu0
    %vm170 = vcmp.gt.f32.partialorder %v167, 0.0
    %v171 = vmul.f32 %v167, 0.01
    %v172 = vsel %vm170, %v167, %v171
    %v173 = vpack.c.bf16 %v172, %v172
    %v174 = vld [vmem:[#allocation7] sm:$0xf]
    %v175 = vld [vmem:[#allocation7 + $0x4] sm:$0xf]
    %v176 = vld [vmem:[#allocation7 + $0x8] sm:$0xf]
    %v177 = vld [vmem:[#allocation7 + $0xc] sm:$0xf]
    %v178 = vld [vmem:[#allocation7 + $0x10] sm:$0xf]
    %v179 = vld [vmem:[#allocation7 + $0x14] sm:$0xf]
    %v180 = vld [vmem:[#allocation7 + $0x18] sm:$0xf]
    %v181 = vld [vmem:[#allocation7 + $0x1c] sm:$0xf]
    %v182 = vld [vmem:[#allocation7 + $0x20] sm:$0xf]
    %v183 = vld [vmem:[#allocation7 + $0x24] sm:$0xf]
    %v184 = vld [vmem:[#allocation7 + $0x28] sm:$0xf]
    %v185 = vld [vmem:[#allocation7 + $0x2c] sm:$0xf]
    %v186 = vld [vmem:[#allocation7 + $0x30] sm:$0xf]
    %v187 = vld [vmem:[#allocation7 + $0x34] sm:$0xf]
    %v188 = vld [vmem:[#allocation7 + $0x38] sm:$0xf]
    %v189 = vld [vmem:[#allocation7 + $0x3c] sm:$0xf]
    %v190 = vld [vmem:[%s4] sm:$0x1]
    %v192 = vperm.slane %v190, 0
    %v210 = vunpack.c.l.b16 %v174
    %v211 = vunpack.c.l.b16 %v175
    %v212 = vunpack.c.l.b16 %v176
    %v213 = vunpack.c.l.b16 %v177
    %v214 = vunpack.c.l.b16 %v178
    %v215 = vunpack.c.l.b16 %v179
    %v216 = vunpack.c.l.b16 %v180
    %v217 = vunpack.c.l.b16 %v181
    %v218 = vunpack.c.l.b16 %v182
    %v219 = vunpack.c.l.b16 %v183
    %v220 = vunpack.c.l.b16 %v184
    %v221 = vunpack.c.l.b16 %v185
    %v222 = vunpack.c.l.b16 %v186
    %v223 = vunpack.c.l.b16 %v187
    %v224 = vunpack.c.l.b16 %v188
    %v225 = vunpack.c.l.b16 %v189
    %v226 = vpack.c.b16 %v211, %v210
    %v227 = vpack.c.b16 %v213, %v212
    %v228 = vpack.c.b16 %v215, %v214
    %v229 = vpack.c.b16 %v217, %v216
    %v230 = vpack.c.b16 %v219, %v218
    %v231 = vpack.c.b16 %v221, %v220
    %v232 = vpack.c.b16 %v223, %v222
    %v233 = vpack.c.b16 %v225, %v224
    %242 = vmatpush.bf16.msra.mxu0 %v233
    %243 = vmatpush.bf16.msra.mxu0 %v232
    %244 = vmatpush.bf16.msra.mxu0 %v231
    %245 = vmatpush.bf16.msra.mxu0 %v230
    %246 = vmatpush.bf16.msra.mxu0 %v229
    %247 = vmatpush.bf16.msra.mxu0 %v228
    %248 = vmatpush.bf16.msra.mxu0 %v227
    %249 = vmatpush.bf16.msra.mxu0 %v226
    %250 = vmatmul.bf16.gmra.mxu0 %v173
    %v251 = vpop.f32.mrf.mxu0
    %v252 = vadd.f32 %v192, %v251
    %v253 = vpop.f32.mrf.mxu0
    %254 = vdwg.mxu0
    %vm255 = vcmp.gt.f32.partialorder %v252, 0.0
    %v256 = vmul.f32 %v252, 0.01
    %v257 = vsel %vm255, %v252, %v256
    %v258 = vpack.c.bf16 %v257, %v257
    %v259 = vld [vmem:[#allocation8] sm:$0xf]
    %v260 = vld [vmem:[#allocation8 + $0x4] sm:$0xf]
    %v261 = vld [vmem:[#allocation8 + $0x8] sm:$0xf]
    %v262 = vld [vmem:[#allocation8 + $0xc] sm:$0xf]
    %v263 = vld [vmem:[#allocation8 + $0x10] sm:$0xf]
    %v264 = vld [vmem:[#allocation8 + $0x14] sm:$0xf]
    %v265 = vld [vmem:[#allocation8 + $0x18] sm:$0xf]
    %v266 = vld [vmem:[#allocation8 + $0x1c] sm:$0xf]
    %v267 = vld [vmem:[#allocation8 + $0x20] sm:$0xf]
    %v268 = vld [vmem:[#allocation8 + $0x24] sm:$0xf]
    %v269 = vld [vmem:[#allocation8 + $0x28] sm:$0xf]
    %v270 = vld [vmem:[#allocation8 + $0x2c] sm:$0xf]
    %v271 = vld [vmem:[#allocation8 + $0x30] sm:$0xf]
    %v272 = vld [vmem:[#allocation8 + $0x34] sm:$0xf]
    %v273 = vld [vmem:[#allocation8 + $0x38] sm:$0xf]
    %v274 = vld [vmem:[#allocation8 + $0x3c] sm:$0xf]
    %v275 = vld [vmem:[%s6] sm:$0x1]
    %v277 = vperm.slane %v275, 0
    %v295 = vunpack.c.l.b16 %v259
    %v296 = vunpack.c.l.b16 %v260
    %v297 = vunpack.c.l.b16 %v261
    %v298 = vunpack.c.l.b16 %v262
    %v299 = vunpack.c.l.b16 %v263
    %v300 = vunpack.c.l.b16 %v264
    %v301 = vunpack.c.l.b16 %v265
    %v302 = vunpack.c.l.b16 %v266
    %v303 = vunpack.c.l.b16 %v267
    %v304 = vunpack.c.l.b16 %v268
    %v305 = vunpack.c.l.b16 %v269
    %v306 = vunpack.c.l.b16 %v270
    %v307 = vunpack.c.l.b16 %v271
    %v308 = vunpack.c.l.b16 %v272
    %v309 = vunpack.c.l.b16 %v273
    %v310 = vunpack.c.l.b16 %v274
    %v311 = vpack.c.b16 %v296, %v295
    %v312 = vpack.c.b16 %v298, %v297
    %v313 = vpack.c.b16 %v300, %v299
    %v314 = vpack.c.b16 %v302, %v301
    %v315 = vpack.c.b16 %v304, %v303
    %v316 = vpack.c.b16 %v306, %v305
    %v317 = vpack.c.b16 %v308, %v307
    %v318 = vpack.c.b16 %v310, %v309
    %327 = vmatpush.bf16.msra.mxu0 %v318
    %328 = vmatpush.bf16.msra.mxu0 %v317
    %329 = vmatpush.bf16.msra.mxu0 %v316
    %330 = vmatpush.bf16.msra.mxu0 %v315
    %331 = vmatpush.bf16.msra.mxu0 %v314
    %332 = vmatpush.bf16.msra.mxu0 %v313
    %333 = vmatpush.bf16.msra.mxu0 %v312
    %334 = vmatpush.bf16.msra.mxu0 %v311
    %335 = vmatmul.bf16.gmra.mxu0 %v258
    %v336 = vpop.f32.mrf.mxu0
    %v337 = vadd.f32 %v277, %v336
    %v338 = vpop.f32.mrf.mxu0
    %339 = vdwg.mxu0
    %340 = vst [vmem:[#allocation10] sm:$0xff] %v337
    // Predicated region
    $region46: #{tpu_custom_call.1} parent=1 // pred_check
      _
    $region47: #{tpu_custom_call.1} parent=1 // pred_check_branch
      %342 = sbr.rel (0) target = $region49
    $region48: #{tpu_custom_call.1} parent=1 // pred_region
      %344 = vsyncadd [#allocation4], 0
      %s346 = sshll.u32 [#allocation10], 4
      %s347 = int_to_ptr.vmem [resolvable:$true] %s346
      %s348 = sshll.u32 %s7, 4
      %s349 = int_to_ptr.hbm [resolvable:$true] %s348
      %351 = dma.vmem_to_hbm [thread:$0]  %s347, 128, %s349, [#allocation4]
    $region49: #{tpu_custom_call.1} parent=1 // pred_fallthru
      _
    // Predicated region
    $region50: #{tpu_custom_call.1} parent=1 // pred_check
      _
    $region51: #{tpu_custom_call.1} parent=1 // pred_check_branch
      %353 = sbr.rel (0) target = $region53
    $region52: #{tpu_custom_call.1} parent=1 // pred_region
      %355 = dma.done [#allocation4], 128
    $region53: #{tpu_custom_call.1} parent=1 // pred_fallthru
      _
    %356 = vsyncpa [#allocation3], 1
    %357 = vsyncpa [#allocation6], 1
    %358 = vsyncpa [#allocation9], 1
    %359 = vsyncpa [#allocation4], 1

</llo_original>
